<compile_context>
chip_gen: v7x
topology: tpu7x:2x2x1
jax: 0.10.0
libtpu: 0.0.40
codegen_flags: <defaults>
</compile_context>

<pallas_src>
import jax
import jax.numpy as jnp
from jax.experimental import pallas as pl
from jax.experimental.pallas import tpu as pltpu

EPS = 1e-8


def _stft_mag_l1_kernel(pf_ref, tf_ref, basis_ref, out_ref):
    i = pl.program_id(1)

    @pl.when(i == 0)
    def _():
        out_ref[...] = jnp.zeros_like(out_ref)

    tm = pf_ref.shape[0]
    fp = basis_ref.shape[-1] // 2          # padded freq-bin count (lane-aligned)

    basis = basis_ref[...]                 # (Kp, 2*Fp) bf16, [w*cos | -w*sin]
    # Two MXU matmuls sharing one resident RHS — no concat copy, f32 accumulation.
    res_p = jnp.dot(pf_ref[...], basis, preferred_element_type=jnp.float32)  # (TM, 2*Fp)
    res_t = jnp.dot(tf_ref[...], basis, preferred_element_type=jnp.float32)

    def mag(res):
        re = res[:, :fp]
        im = res[:, fp:]
        return jnp.maximum(jnp.sqrt(re * re + im * im), EPS)

    diff = jnp.abs(mag(res_p) - mag(res_t))                                  # (TM, Fp)

    # Fold rows into an (8, Fp) partial: pure vreg-aligned VPU adds, accumulated in the
    # resident (8, Fp) output block (lane-dense, 128-multiple width).
    out_ref[...] += diff.reshape(tm // 8, 8, fp).sum(axis=0)


def _hann_window_periodic(nfft):
    n = jnp.arange(nfft, dtype=jnp.float32)
    return 0.5 * (1.0 - jnp.cos(2.0 * jnp.pi * n / nfft))


def _frames(x, reference_channel, nfft, hop, dtype=jnp.float32):
    """x: (B, C, T) -> UNwindowed STFT frames (B*n_frames, nfft), torch.stft(center=True)."""
    B, _, T = x.shape
    xr = x[:, reference_channel, :].astype(dtype)
    xp = jnp.pad(xr, ((0, 0), (nfft // 2, nfft // 2)), mode="reflect")
    n_frames = 1 + T // hop
    if nfft % hop == 0:
        # No gather: chop into hop-sized chunks, build frames from shifted slices.
        r = nfft // hop
        n_chunks = n_frames - 1 + r        # (n_frames-1)*hop + nfft <= T + nfft always
        ch = xp[:, : n_chunks * hop].reshape(B, n_chunks, hop)
        fr = jnp.concatenate([ch[:, j:j + n_frames, :] for j in range(r)], axis=-1)
    else:
        # TODO(synk): gather fallback when hop does not divide nfft.
        idx = hop * jnp.arange(n_frames)[:, None] + jnp.arange(nfft)[None, :]
        fr = xp[:, idx]
    return fr.reshape(B * n_frames, nfft), n_frames


def _round_up(x, m):
    return ((x + m - 1) // m) * m


def stft_mag_loss(predicted, target, *, nfft=512, hop=256, reference_channel=0,
                  tile_m=2048, num_partials=2):
    B, _, T = predicted.shape
    if T <= nfft // 2:
        raise ValueError("reflect padding requires T > nfft // 2 (same as torch.stft)")
    nfreq = nfft // 2 + 1

    # Windowed DFT basis (window folded in): (nfft, nfreq) cos / sin halves.
    window = _hann_window_periodic(nfft)
    n = jnp.arange(nfft, dtype=jnp.float32)
    k = jnp.arange(nfreq, dtype=jnp.float32)
    phase = 2.0 * jnp.pi * n[:, None] * k[None, :] / nfft
    cos_w = window[:, None] * jnp.cos(phase)
    sin_w = -window[:, None] * jnp.sin(phase)          # sign irrelevant for magnitude

    # bf16 frame streams (dominant, length-scaling HBM traffic); math stays f32 in-kernel.
    pf, n_frames = _frames(predicted, reference_channel, nfft, hop, dtype=jnp.bfloat16)
    tf, _ = _frames(target, reference_channel, nfft, hop, dtype=jnp.bfloat16)

    # Pad to TPU-friendly sizes; all padding is loss-neutral (see header).
    M = B * n_frames
    Kp = _round_up(nfft, 128)
    Fp = _round_up(nfreq, 128)

    P = max(1, num_partials)               # 2 -> shards the "parallel" axis on v7x
    frames_per_part = -(-M // P)
    tm = _round_up(min(tile_m, _round_up(frames_per_part, 16)), 16)  # bf16 sublane pack
    inner = -(-frames_per_part // tm)
    Mp = P * inner * tm

    pf = jnp.pad(pf, ((0, Mp - M), (0, Kp - nfft)))
    tf = jnp.pad(tf, ((0, Mp - M), (0, Kp - nfft)))
    basis = jnp.concatenate(
        [jnp.pad(cos_w, ((0, Kp - nfft), (0, Fp - nfreq))),
         jnp.pad(sin_w, ((0, Kp - nfft), (0, Fp - nfreq)))], axis=1
    ).astype(jnp.bfloat16)                              # (Kp, 2*Fp)

    partials = pl.pallas_call(
        _stft_mag_l1_kernel,
        out_shape=jax.ShapeDtypeStruct((P * 8, Fp), jnp.float32),
        grid=(P, inner),
        in_specs=[
            pl.BlockSpec((tm, Kp), lambda p, i: (p * inner + i, 0)),
            pl.BlockSpec((tm, Kp), lambda p, i: (p * inner + i, 0)),
            pl.BlockSpec((Kp, 2 * Fp), lambda p, i: (0, 0)),
        ],
        out_specs=pl.BlockSpec((8, Fp), lambda p, i: (p, 0)),
        compiler_params=pltpu.CompilerParams(
            dimension_semantics=("parallel", "arbitrary"),
            vmem_limit_bytes=48 * 1024 * 1024,          # stays under v7x's 64 MiB VMEM
        ),
    )(pf, tf, basis)

    # torch.nn.functional.l1_loss default reduction='mean' over (B, nfreq, n_frames)
    return jnp.sum(partials) / (B * nfreq * n_frames)


def _reference_loss(predicted, target, *, nfft, hop, reference_channel=0):
    """Pure-JAX f32 reference mimicking torch.stft(center=True, onesided, hann window)."""
    window = _hann_window_periodic(nfft)

    def mag(x):
        fr, _ = _frames(x, reference_channel, nfft, hop, dtype=jnp.float32)
        spec = jnp.fft.rfft(fr * window[None, :], n=nfft, axis=-1)
        return jnp.maximum(jnp.abs(spec), EPS)

    return jnp.mean(jnp.abs(mag(predicted) - mag(target)))


if __name__ == "__main__":
    key = jax.random.PRNGKey(0)
    k1, k2 = jax.random.split(key)
    B, C, T = 2, 4, 512                    # small shapes; kernel uses nfft=128, hop=64
    predicted = jax.random.normal(k1, (B, C, T), dtype=jnp.float32)
    target = jax.random.normal(k2, (B, C, T), dtype=jnp.float32)

    loss = stft_mag_loss(predicted, target, nfft=128, hop=64)
    loss = jax.block_until_ready(loss)

    ref = _reference_loss(predicted, target, nfft=128, hop=64)
    # bf16 frame/basis streams: tolerance relaxed vs the all-f32 check.
    assert jnp.allclose(loss, ref, rtol=2e-2, atol=2e-3), (loss, ref)

    print("KERNEL_OK")
</pallas_src>

<mosaic_0001>
module attributes {stable_mosaic.version = 11 : i64} {
  func.func @_stft_mag_l1_kernel(%arg0: i32, %arg1: i32, %arg2: memref<16x128xbf16, #tpu.memory_space<vmem>>, %arg3: memref<16x128xbf16, #tpu.memory_space<vmem>>, %arg4: memref<128x256xbf16, #tpu.memory_space<vmem>>, %arg5: memref<8x128xf32, #tpu.memory_space<vmem>>) attributes {dimension_semantics = [#tpu.dimension_semantics<parallel>, #tpu.dimension_semantics<arbitrary>], iteration_bounds = array<i64: 2, 1>, scalar_prefetch = 0 : i64, scratch_operands = 0 : i64, tpu.core_type = #tpu.core_type<tc>, window_params = [{transform_indices = @transform_0, window_bounds = array<i64: 16, 128>}, {transform_indices = @transform_1, window_bounds = array<i64: 16, 128>}, {pipeline_mode = #tpu.pipeline_mode<synchronous>, transform_indices = @transform_2, window_bounds = array<i64: 128, 256>}, {transform_indices = @transform_3, window_bounds = array<i64: 8, 128>}]} {
    %c0_i32 = arith.constant 0 : i32
    %0 = arith.cmpi eq, %arg1, %c0_i32 : i32
    %1 = arith.extui %0 : i1 to i32
    %c0_i32_0 = arith.constant 0 : i32
    %2 = arith.cmpi ne, %1, %c0_i32_0 : i32
    scf.if %2 {
      %cst_14 = arith.constant 0.000000e+00 : f32
      %31 = vector.broadcast %cst_14 : f32 to vector<8x128xf32>
      %c0_15 = arith.constant 0 : index
      %c0_16 = arith.constant 0 : index
      %32 = vector.load %arg5[%c0_15, %c0_16] : memref<8x128xf32, #tpu.memory_space<vmem>>, vector<8x128xf32>
      tpu.vector_store %arg5[%c0_15, %c0_16], %31 {strides = array<i32>} : memref<8x128xf32, #tpu.memory_space<vmem>>, vector<8x128xf32>,
    } else {
    }
    %c0 = arith.constant 0 : index
    %c0_1 = arith.constant 0 : index
    %3 = vector.load %arg4[%c0, %c0_1] : memref<128x256xbf16, #tpu.memory_space<vmem>>, vector<128x256xbf16>
    %c0_2 = arith.constant 0 : index
    %c0_3 = arith.constant 0 : index
    %4 = vector.load %arg2[%c0_2, %c0_3] : memref<16x128xbf16, #tpu.memory_space<vmem>>, vector<16x128xbf16>
    %cst = arith.constant dense<0.000000e+00> : vector<16x256xf32>
    %5 = tpu.matmul %4, %3, %cst {dimension_numbers = #tpu.dot_dimension_numbers<[1], [0], [0], [1], [0, 0, 1, 1], [], []>} : vector<16x128xbf16>, vector<128x256xbf16>, vector<16x256xf32> -> vector<16x256xf32>
    %c0_4 = arith.constant 0 : index
    %c0_5 = arith.constant 0 : index
    %6 = vector.load %arg3[%c0_4, %c0_5] : memref<16x128xbf16, #tpu.memory_space<vmem>>, vector<16x128xbf16>
    %cst_6 = arith.constant dense<0.000000e+00> : vector<16x256xf32>
    %7 = tpu.matmul %6, %3, %cst_6 {dimension_numbers = #tpu.dot_dimension_numbers<[1], [0], [0], [1], [0, 0, 1, 1], [], []>} : vector<16x128xbf16>, vector<128x256xbf16>, vector<16x256xf32> -> vector<16x256xf32>
    %8 = vector.extract_strided_slice %5 {offsets = [0, 0], sizes = [16, 128], strides = [1, 1]} : vector<16x256xf32> to vector<16x128xf32>
    %9 = vector.extract_strided_slice %5 {offsets = [0, 128], sizes = [16, 128], strides = [1, 1]} : vector<16x256xf32> to vector<16x128xf32>
    %10 = arith.mulf %8, %8 : vector<16x128xf32>
    %11 = arith.mulf %9, %9 : vector<16x128xf32>
    %12 = arith.addf %10, %11 : vector<16x128xf32>
    %13 = math.sqrt %12 : vector<16x128xf32>
    %cst_7 = arith.constant 9.99999993E-9 : f32
    %14 = vector.broadcast %cst_7 : f32 to vector<16x128xf32>
    %15 = arith.maximumf %13, %14 : vector<16x128xf32>
    %16 = vector.extract_strided_slice %7 {offsets = [0, 0], sizes = [16, 128], strides = [1, 1]} : vector<16x256xf32> to vector<16x128xf32>
    %17 = vector.extract_strided_slice %7 {offsets = [0, 128], sizes = [16, 128], strides = [1, 1]} : vector<16x256xf32> to vector<16x128xf32>
    %18 = arith.mulf %16, %16 : vector<16x128xf32>
    %19 = arith.mulf %17, %17 : vector<16x128xf32>
    %20 = arith.addf %18, %19 : vector<16x128xf32>
    %21 = math.sqrt %20 : vector<16x128xf32>
    %cst_8 = arith.constant 9.99999993E-9 : f32
    %22 = vector.broadcast %cst_8 : f32 to vector<16x128xf32>
    %23 = arith.maximumf %21, %22 : vector<16x128xf32>
    %24 = arith.subf %15, %23 : vector<16x128xf32>
    %25 = math.absf %24 : vector<16x128xf32>
    %c0_9 = arith.constant 0 : index
    %c0_10 = arith.constant 0 : index
    %26 = vector.load %arg5[%c0_9, %c0_10] : memref<8x128xf32, #tpu.memory_space<vmem>>, vector<8x128xf32>
    %27 = vector.shape_cast %25 : vector<16x128xf32> to vector<2x8x128xf32>
    %cst_11 = arith.constant dense<0.000000e+00> : vector<8x128xf32>
    %28 = vector.multi_reduction <add>, %27, %cst_11 [0] : vector<2x8x128xf32> to vector<8x128xf32>
    %29 = arith.addf %26, %28 : vector<8x128xf32>
    %c0_12 = arith.constant 0 : index
    %c0_13 = arith.constant 0 : index
    %30 = vector.load %arg5[%c0_12, %c0_13] : memref<8x128xf32, #tpu.memory_space<vmem>>, vector<8x128xf32>
    tpu.vector_store %arg5[%c0_12, %c0_13], %29 {strides = array<i32>} : memref<8x128xf32, #tpu.memory_space<vmem>>, vector<8x128xf32>,
    return
  }
  func.func @transform_0(%arg0: i32, %arg1: i32) -> (i32, i32) {
    %c1_i32 = arith.constant 1 : i32
    %0 = arith.muli %arg0, %c1_i32 : i32
    %1 = arith.addi %0, %arg1 : i32
    %c0_i32 = arith.constant 0 : i32
    %c0_i32_0 = arith.constant 0 : i32
    return %1, %c0_i32 : i32, i32
  }
  func.func @transform_1(%arg0: i32, %arg1: i32) -> (i32, i32) {
    %c1_i32 = arith.constant 1 : i32
    %0 = arith.muli %arg0, %c1_i32 : i32
    %1 = arith.addi %0, %arg1 : i32
    %c0_i32 = arith.constant 0 : i32
    %c0_i32_0 = arith.constant 0 : i32
    return %1, %c0_i32 : i32, i32
  }
  func.func @transform_2(%arg0: i32, %arg1: i32) -> (i32, i32) {
    %c0_i32 = arith.constant 0 : i32
    %c0_i32_0 = arith.constant 0 : i32
    %c0_i32_1 = arith.constant 0 : i32
    return %c0_i32, %c0_i32_0 : i32, i32
  }
  func.func @transform_3(%arg0: i32, %arg1: i32) -> (i32, i32) {
    %c0_i32 = arith.constant 0 : i32
    %c0_i32_0 = arith.constant 0 : i32
    return %arg0, %c0_i32 : i32, i32
  }
}

</mosaic_0001>

<llo_original>
// kernel: tpu_custom_call.1
$region0: #{tpu_custom_call.1}
  #allocation0 [shape = 'u32[]', space=smem, size = 0x4, offset = 0x4, fixed_abs, tag = 'smem constant byte address 0x4 - core index']
  #allocation1 [shape = 'u32[144,128]{1,0:T(1,128)}', space=vmem, size = 0x12000, scoped, tag = 'internal scratch']
  %s0 = inlined_call_operand.hbm [shape: bf16[32,128], index: 0, kind: input, shape index: {}]
  %s1 = inlined_call_operand.hbm [shape: bf16[32,128], index: 1, kind: input, shape index: {}]
  %s2 = inlined_call_operand.hbm [shape: bf16[128,256], index: 2, kind: input, shape index: {}]
  %s3 = inlined_call_operand.hbm [shape: f32[16,128], index: 3, kind: output, shape index: {}]
  %s4 = sld [smem:[#allocation0]]
  $region61: #{tpu_custom_call.1} parent=0
    _
  %s6 = ssub.s32 1, %s4
  %s7 = scalar_select 0, %s6, %s4
  $region1: #{tpu_custom_call.1} parent=0
    #allocation2 [shape = 'u8[8192]{0}', space=vmem, size = 0x2000, scoped, tag = 'input window, operand 0']
    #allocation3 [shape = 's32[2]{0}', space=sflag, size = 0x8, scoped, tag = 'scoped memory for tpu_custom_call.1']
    #allocation4 [shape = 's32[2]{0}', space=sflag, size = 0x8, scoped, tag = 'scoped memory for tpu_custom_call.1']
    #allocation5 [shape = 'u8[8192]{0}', space=vmem, size = 0x2000, scoped, tag = 'input window, operand 1']
    #allocation6 [shape = 's32[2]{0}', space=sflag, size = 0x8, scoped, tag = 'scoped memory for tpu_custom_call.1']
    #allocation7 [shape = 'u8[65536]{0}', space=vmem, size = 0x10000, scoped, tag = 'input window, operand 2, single buffered']
    #allocation8 [shape = 'u8[8192]{0}', space=vmem, size = 0x2000, scoped, tag = 'output window, operand 0']
    %8 = vsyncpa [#allocation3], 0
    %s9 = scalar_lea.sflag [#allocation3], 1
    %10 = vsyncpa %s9, 0
    %11 = vsyncpa [#allocation6], 0
    %s12 = scalar_lea.sflag [#allocation6], 1
    %13 = vsyncpa %s12, 0
    %14 = vsyncpa [#allocation4], 0
    %s15 = scalar_lea.sflag [#allocation4], 1
    %16 = vsyncpa %s15, 0
    loop: start=0, step=1, limit=4
    $region2: #{tpu_custom_call.1} parent=1 // loop_pre_header
      _
    $region3: #{tpu_custom_call.1} parent=1 // loop_header
      %s18 = sphi 0, %s22
      %p19 = scmp.ge.s32.totalorder %s18, 4
      %s25 = sphi 0, %s37
      %s26 = sphi 0, %s33
      %s27 = sphi 0, %s25
      %s28 = sphi 0, %s26
      %s29 = sphi 0, %s27
      %s30 = sphi 0, %s28
      %s42 = sphi 0, %s44
      %s45 = sphi 0, %s42
      %s46 = sphi 0, %s45
      %s62 = sphi 0, %s46
      %s70 = sphi 0, %s72
      %s73 = sphi 0, %s70
      %s74 = sphi 0, %s73
      %s90 = sphi 0, %s74
      %s94 = sphi 0, %s94
      %s96 = sphi 0, %s94
      %s97 = sphi 0, %s96
      %s111 = sphi 0, %s97
      %s117 = sphi 0, %s119
      %s120 = sphi 0, %s117
      %s121 = sphi 0, %s120
      %s137 = sphi 0, %s121
    $region4: #{tpu_custom_call.1} parent=1 // loop_header_branch
      %21 = sbr.rel (%p19) target = $region8
    $region5: #{tpu_custom_call.1} parent=1 // loop_body
      %s23 = ssub.s32 %s18, 1
      %s24 = ssub.s32 %s18, 2
      %s31 = sadd.s32 1, %s26
      %p32 = scmp.ge.s32.totalorder %s31, 1
      %s33 = scalar_select %p32, 0, %s31
      %s34 = sadd.s32 1, %s25
      %s35 = scalar_select %p32, %s34, %s25
      %p36 = scmp.ge.s32.totalorder %s35, 2
      %s37 = scalar_select %p36, 0, %s35
      %s38 = sadd.s32 %s25, %s26
      %s39 = sadd.s32 %s37, %s33
      %s40 = ssub.s32 %s38, %s39
      %p41 = scmp.eq.s32.totalorder %s40, 0
      %s43 = sadd.s32 %s42, 1
      %s44 = scalar_select %p41, %s42, %s43
      %p47 = pneg %p41
      %p48 = scmp.eq.s32.totalorder %s18, 1
      %p49 = por %p47, %p48
      %p50 = scmp.ne.s32.totalorder %s42, %s45
      %p51 = scmp.eq.s32.totalorder %s18, 0
      %p52 = por %p50, %p51
      %p53 = scmp.ne.s32.totalorder %s42, %s45
      %p54 = scmp.eq.s32.totalorder %s23, 1
      %p55 = por %p53, %p54
      %p56 = scmp.ne.s32.totalorder %s45, %s46
      %p57 = scmp.eq.s32.totalorder %s23, 0
      %p58 = por %p56, %p57
      %p59 = scmp.ne.s32.totalorder %s45, %s46
      %p60 = scmp.eq.s32.totalorder %s24, 1
      %p61 = por %p59, %p60
      %p63 = scmp.ne.s32.totalorder %s46, %s62
      %p64 = scmp.eq.s32.totalorder %s24, 0
      %p65 = por %p63, %p64
      %s66 = sadd.s32 %s25, %s26
      %s67 = sadd.s32 %s37, %s33
      %s68 = ssub.s32 %s66, %s67
      %p69 = scmp.eq.s32.totalorder %s68, 0
      %s71 = sadd.s32 %s70, 1
      %s72 = scalar_select %p69, %s70, %s71
      %p75 = pneg %p69
      %p76 = scmp.eq.s32.totalorder %s18, 1
      %p77 = por %p75, %p76
      %p78 = scmp.ne.s32.totalorder %s70, %s73
      %p79 = scmp.eq.s32.totalorder %s18, 0
      %p80 = por %p78, %p79
      %p81 = scmp.ne.s32.totalorder %s70, %s73
      %p82 = scmp.eq.s32.totalorder %s23, 1
      %p83 = por %p81, %p82
      %p84 = scmp.ne.s32.totalorder %s73, %s74
      %p85 = scmp.eq.s32.totalorder %s23, 0
      %p86 = por %p84, %p85
      %p87 = scmp.ne.s32.totalorder %s73, %s74
      %p88 = scmp.eq.s32.totalorder %s24, 1
      %p89 = por %p87, %p88
      %p91 = scmp.ne.s32.totalorder %s74, %s90
      %p92 = scmp.eq.s32.totalorder %s24, 0
      %p93 = por %p91, %p92
      %s95 = sadd.s32 %s94, 1
      %p98 = scmp.eq.s32.totalorder %s18, 1
      %p99 = scmp.ne.s32.totalorder %s94, %s96
      %p100 = scmp.eq.s32.totalorder %s18, 0
      %p101 = por %p99, %p100
      %p102 = scmp.ne.s32.totalorder %s94, %s96
      %p103 = scmp.eq.s32.totalorder %s23, 1
      %p104 = por %p102, %p103
      %p105 = scmp.ne.s32.totalorder %s96, %s97
      %p106 = scmp.eq.s32.totalorder %s23, 0
      %p107 = por %p105, %p106
      %p108 = scmp.ne.s32.totalorder %s96, %s97
      %p109 = scmp.eq.s32.totalorder %s24, 1
      %p110 = por %p108, %p109
      %p112 = scmp.ne.s32.totalorder %s97, %s111
      %p113 = scmp.eq.s32.totalorder %s24, 0
      %p114 = por %p112, %p113
      %s115 = ssub.s32 %s25, %s37
      %p116 = scmp.eq.s32.totalorder %s115, 0
      %s118 = sadd.s32 %s117, 1
      %s119 = scalar_select %p116, %s117, %s118
      %p122 = pneg %p116
      %p123 = scmp.eq.s32.totalorder %s18, 1
      %p124 = por %p122, %p123
      %p125 = scmp.ne.s32.totalorder %s117, %s120
      %p126 = scmp.eq.s32.totalorder %s18, 0
      %p127 = por %p125, %p126
      %p128 = scmp.ne.s32.totalorder %s117, %s120
      %p129 = scmp.eq.s32.totalorder %s23, 1
      %p130 = por %p128, %p129
      %p131 = scmp.ne.s32.totalorder %s120, %s121
      %p132 = scmp.eq.s32.totalorder %s23, 0
      %p133 = por %p131, %p132
      %p134 = scmp.ne.s32.totalorder %s120, %s121
      %p135 = scmp.eq.s32.totalorder %s24, 1
      %p136 = por %p134, %p135
      %p138 = scmp.ne.s32.totalorder %s121, %s137
      %p139 = scmp.eq.s32.totalorder %s24, 0
      %p140 = por %p138, %p139
      %p141 = scmp.le.s32.totalorder 1, %s18
      %p142 = scmp.lt.s32.totalorder %s18, 3
      %p143 = pnand %p141, %p142
      %p144 = pneg %p143
      // Predicated region
      $region9: #{tpu_custom_call.1} parent=5 // pred_check
        _
      $region10: #{tpu_custom_call.1} parent=5 // pred_check_branch
        %146 = sbr.rel (%p143) target = $region12
      $region11: #{tpu_custom_call.1} parent=5 // pred_region
        %s147 = ssub.s32 %s18, 1
        // Predicated region
        $region13: #{tpu_custom_call.1} parent=11 // pred_check
          %p148 = pneg %p107
        $region14: #{tpu_custom_call.1} parent=11 // pred_check_branch
          %150 = sbr.rel (%p148) target = $region16
        $region15: #{tpu_custom_call.1} parent=11 // pred_region
          %s152 = ssub.s32 2048, 2048
          %153 = vsyncadd [#allocation6], %s152
          %s154 = sshll.u32 [#allocation7], 4
          %s155 = int_to_ptr.vmem [resolvable:$true] %s154
          %160 = dma.hbm_to_vmem [thread:$0]  %s2, 2048, %s155, [#allocation6], 128, 128, 8
        $region16: #{tpu_custom_call.1} parent=11 // pred_fallthru
          _
      $region12: #{tpu_custom_call.1} parent=5 // pred_fallthru
        _
      %p161 = scmp.lt.s32.totalorder %s18, 2
      // Predicated region
      $region17: #{tpu_custom_call.1} parent=5 // pred_check
        %p162 = pneg %p161
      $region18: #{tpu_custom_call.1} parent=5 // pred_check_branch
        %164 = sbr.rel (%p162) target = $region20
      $region19: #{tpu_custom_call.1} parent=5 // pred_region
        // Predicated region
        $region21: #{tpu_custom_call.1} parent=19 // pred_check
          %p165 = pneg %p52
        $region22: #{tpu_custom_call.1} parent=19 // pred_check_branch
          %167 = sbr.rel (%p165) target = $region24
        $region23: #{tpu_custom_call.1} parent=19 // pred_region
          %s168 = sand.u32 %s42, 1
          %s169 = scalar_lea.sflag [#allocation3], %s168
          %s170 = sand.u32 %s42, 1
          %s171 = smul.addr %s170, 8
          %s172 = scalar_lea.vmem [#allocation2], %s171
          %s173 = sadd.s32 %s25, %s26
          %s174 = smul.u32 2, %s173
          %s176 = ssub.s32 128, 128
          %177 = vsyncadd %s169, %s176
          %s178 = smul.addr %s174, 64
          %s179 = scalar_lea.hbm %s0, %s178
          %s180 = sshll.u32 %s172, 4
          %s181 = int_to_ptr.vmem [resolvable:$true] %s180
          %186 = dma.hbm_to_vmem [thread:$0]  %s179, 128, %s181, %s169, 64, 64, 4
        $region24: #{tpu_custom_call.1} parent=19 // pred_fallthru
          _
        // Predicated region
        $region25: #{tpu_custom_call.1} parent=19 // pred_check
          %p187 = pneg %p80
        $region26: #{tpu_custom_call.1} parent=19 // pred_check_branch
          %189 = sbr.rel (%p187) target = $region28
        $region27: #{tpu_custom_call.1} parent=19 // pred_region
          %s190 = sand.u32 %s18, 1
          %s191 = scalar_lea.sflag [#allocation6], %s190
          %s192 = sand.u32 %s70, 1
          %s193 = smul.addr %s192, 8
          %s194 = scalar_lea.vmem [#allocation5], %s193
          %s195 = sadd.s32 %s25, %s26
          %s196 = smul.u32 2, %s195
          %s198 = ssub.s32 128, 128
          %199 = vsyncadd %s191, %s198
          %s200 = smul.addr %s196, 64
          %s201 = scalar_lea.hbm %s1, %s200
          %s202 = sshll.u32 %s194, 4
          %s203 = int_to_ptr.vmem [resolvable:$true] %s202
          %208 = dma.hbm_to_vmem [thread:$0]  %s201, 128, %s203, %s191, 64, 64, 4
        $region28: #{tpu_custom_call.1} parent=19 // pred_fallthru
          _
      $region20: #{tpu_custom_call.1} parent=5 // pred_fallthru
        _
      %p209 = scmp.le.s32.totalorder 1, %s18
      %p210 = scmp.lt.s32.totalorder %s18, 3
      %p211 = pnand %p209, %p210
      %p212 = pneg %p211
      // Predicated region
      $region29: #{tpu_custom_call.1} parent=5 // pred_check
        _
      $region30: #{tpu_custom_call.1} parent=5 // pred_check_branch
        %214 = sbr.rel (%p211) target = $region32
      $region31: #{tpu_custom_call.1} parent=5 // pred_region
        %s215 = ssub.s32 %s18, 1
        %s216 = sand.u32 %s45, 1
        %s217 = scalar_lea.sflag [#allocation3], %s216
        %s218 = sand.u32 %s45, 1
        %s219 = smul.addr %s218, 8
        %s220 = scalar_lea.vmem [#allocation2], %s219
        // Predicated region
        $region33: #{tpu_custom_call.1} parent=31 // pred_check
          %p221 = pneg %p58
        $region34: #{tpu_custom_call.1} parent=31 // pred_check_branch
          %223 = sbr.rel (%p221) target = $region36
        $region35: #{tpu_custom_call.1} parent=31 // pred_region
          %224 = dma.done %s217, 128
        $region36: #{tpu_custom_call.1} parent=31 // pred_fallthru
          _
        %s225 = sand.u32 %s23, 1
        %s226 = scalar_lea.sflag [#allocation6], %s225
        %s227 = sand.u32 %s73, 1
        %s228 = smul.addr %s227, 8
        %s229 = scalar_lea.vmem [#allocation5], %s228
        // Predicated region
        $region37: #{tpu_custom_call.1} parent=31 // pred_check
          %p230 = pneg %p86
        $region38: #{tpu_custom_call.1} parent=31 // pred_check_branch
          %232 = sbr.rel (%p230) target = $region40
        $region39: #{tpu_custom_call.1} parent=31 // pred_region
          %233 = dma.done %s226, 128
        $region40: #{tpu_custom_call.1} parent=31 // pred_fallthru
          _
        // Predicated region
        $region41: #{tpu_custom_call.1} parent=31 // pred_check
          %p234 = pneg %p107
        $region42: #{tpu_custom_call.1} parent=31 // pred_check_branch
          %236 = sbr.rel (%p234) target = $region44
        $region43: #{tpu_custom_call.1} parent=31 // pred_region
          %237 = dma.done [#allocation6], 2048
        $region44: #{tpu_custom_call.1} parent=31 // pred_fallthru
          _
        %s238 = sand.u32 %s45, 1
        %s239 = scalar_lea.sflag [#allocation3], %s238
        %s240 = sand.u32 %s45, 1
        %s241 = smul.addr %s240, 8
        %s242 = scalar_lea.vmem [#allocation2], %s241
        %p243 = pneg %p58
        %p244 = pneg %p55
        %s245 = sand.u32 %s23, 1
        %s246 = scalar_lea.sflag [#allocation6], %s245
        %s247 = sand.u32 %s73, 1
        %s248 = smul.addr %s247, 8
        %s249 = scalar_lea.vmem [#allocation5], %s248
        %p250 = pneg %p86
        %p251 = pneg %p83
        %p252 = pneg %p107
        %p253 = pneg %p104
        %p254 = pneg %p133
        %p255 = pneg %p130
        %s256 = sand.u32 %s120, 1
        %s257 = scalar_lea.sflag [#allocation4], %s256
        %s258 = sand.u32 %s120, 1
        %s259 = smul.addr %s258, 8
        %s260 = scalar_lea.vmem [#allocation8], %s259
        %s261 = sadd.s32 %s27, %s28
        %s262 = smul.u32 2, %s261
        %s263 = sadd.s32 %s27, %s28
        %s264 = smul.u32 2, %s263
        %p266 = scmp.eq.s32.totalorder %s28, 0
        // Predicated region
        $region45: #{tpu_custom_call.1} parent=31 // pred_check
          %p267 = pneg %p266
        $region46: #{tpu_custom_call.1} parent=31 // pred_check_branch
          %269 = sbr.rel (%p267) target = $region48
        $region47: #{tpu_custom_call.1} parent=31 // pred_region
          %270 = vst [vmem:[%s260] sm:$0xff] 0.0
        $region48: #{tpu_custom_call.1} parent=31 // pred_fallthru
          _
        %v271 = vld [vmem:[#allocation7] sm:$0xff]
        %v272 = vld [vmem:[#allocation7 + $0x8] sm:$0xff]
        %v273 = vld [vmem:[#allocation7 + $0x10] sm:$0xff]
        %v274 = vld [vmem:[#allocation7 + $0x18] sm:$0xff]
        %v275 = vld [vmem:[#allocation7 + $0x20] sm:$0xff]
        %v276 = vld [vmem:[#allocation7 + $0x28] sm:$0xff]
        %v277 = vld [vmem:[#allocation7 + $0x30] sm:$0xff]
        %v278 = vld [vmem:[#allocation7 + $0x38] sm:$0xff]
        %v279 = vld [vmem:[#allocation7 + $0x40] sm:$0xff]
        %v280 = vld [vmem:[#allocation7 + $0x48] sm:$0xff]
        %v281 = vld [vmem:[#allocation7 + $0x50] sm:$0xff]
        %v282 = vld [vmem:[#allocation7 + $0x58] sm:$0xff]
        %v283 = vld [vmem:[#allocation7 + $0x60] sm:$0xff]
        %v284 = vld [vmem:[#allocation7 + $0x68] sm:$0xff]
        %v285 = vld [vmem:[#allocation7 + $0x70] sm:$0xff]
        %v286 = vld [vmem:[#allocation7 + $0x78] sm:$0xff]
        %v287 = vld [vmem:[%s220] sm:$0xf]
        %v288 = vld [vmem:[%s220 + $0x4] sm:$0xf]
        %v291 = vunpack.c.l.b16 %v287
        %v292 = vunpack.c.l.b16 %v288
        %v293 = vpack.c.b16 %v292, %v291
        %v311 = vunpack.c.l.b16 %v271
        %v312 = vunpack.c.h.b16 %v271
        %v313 = vunpack.c.l.b16 %v272
        %v314 = vunpack.c.h.b16 %v272
        %v315 = vunpack.c.l.b16 %v273
        %v316 = vunpack.c.h.b16 %v273
        %v317 = vunpack.c.l.b16 %v274
        %v318 = vunpack.c.h.b16 %v274
        %v319 = vunpack.c.l.b16 %v275
        %v320 = vunpack.c.h.b16 %v275
        %v321 = vunpack.c.l.b16 %v276
        %v322 = vunpack.c.h.b16 %v276
        %v323 = vunpack.c.l.b16 %v277
        %v324 = vunpack.c.h.b16 %v277
        %v325 = vunpack.c.l.b16 %v278
        %v326 = vunpack.c.h.b16 %v278
        %v327 = vunpack.c.l.b16 %v279
        %v328 = vunpack.c.h.b16 %v279
        %v329 = vunpack.c.l.b16 %v280
        %v330 = vunpack.c.h.b16 %v280
        %v331 = vunpack.c.l.b16 %v281
        %v332 = vunpack.c.h.b16 %v281
        %v333 = vunpack.c.l.b16 %v282
        %v334 = vunpack.c.h.b16 %v282
        %v335 = vunpack.c.l.b16 %v283
        %v336 = vunpack.c.h.b16 %v283
        %v337 = vunpack.c.l.b16 %v284
        %v338 = vunpack.c.h.b16 %v284
        %v339 = vunpack.c.l.b16 %v285
        %v340 = vunpack.c.h.b16 %v285
        %v341 = vunpack.c.l.b16 %v286
        %v342 = vunpack.c.h.b16 %v286
        %v343 = vpack.c.b16 %v313, %v311
        %v344 = vpack.c.b16 %v314, %v312
        %v345 = vpack.c.b16 %v317, %v315
        %v346 = vpack.c.b16 %v318, %v316
        %v347 = vpack.c.b16 %v321, %v319
        %v348 = vpack.c.b16 %v322, %v320
        %v349 = vpack.c.b16 %v325, %v323
        %v350 = vpack.c.b16 %v326, %v324
        %v351 = vpack.c.b16 %v329, %v327
        %v352 = vpack.c.b16 %v330, %v328
        %v353 = vpack.c.b16 %v333, %v331
        %v354 = vpack.c.b16 %v334, %v332
        %v355 = vpack.c.b16 %v337, %v335
        %v356 = vpack.c.b16 %v338, %v336
        %v357 = vpack.c.b16 %v341, %v339
        %v358 = vpack.c.b16 %v342, %v340
        %375 = vmatprep.subr.bf16.mxu0 %v344
        %376 = vmatpush1.bf16.msra.mxu0 %v343
        %377 = vmatprep.subr.bf16.mxu0 %v346
        %378 = vmatpush1.bf16.msra.mxu0 %v345
        %379 = vmatprep.subr.bf16.mxu0 %v348
        %380 = vmatpush1.bf16.msra.mxu0 %v347
        %381 = vmatprep.subr.bf16.mxu0 %v350
        %382 = vmatpush1.bf16.msra.mxu0 %v349
        %383 = vmatprep.subr.bf16.mxu0 %v352
        %384 = vmatpush1.bf16.msra.mxu0 %v351
        %385 = vmatprep.subr.bf16.mxu0 %v354
        %386 = vmatpush1.bf16.msra.mxu0 %v353
        %387 = vmatprep.subr.bf16.mxu0 %v356
        %388 = vmatpush1.bf16.msra.mxu0 %v355
        %389 = vmatprep.subr.bf16.mxu0 %v358
        %390 = vmatpush1.bf16.msra.mxu0 %v357
        %391 = vmatprep.subr.bf16.mxu0 0
        %392 = vmatpush1.bf16.msra.mxu0 0
        %393 = vmatprep.subr.bf16.mxu0 0
        %394 = vmatpush1.bf16.msra.mxu0 0
        %395 = vmatprep.subr.bf16.mxu0 0
        %396 = vmatpush1.bf16.msra.mxu0 0
        %397 = vmatprep.subr.bf16.mxu0 0
        %398 = vmatpush1.bf16.msra.mxu0 0
        %399 = vmatprep.subr.bf16.mxu0 0
        %400 = vmatpush1.bf16.msra.mxu0 0
        %401 = vmatprep.subr.bf16.mxu0 0
        %402 = vmatpush1.bf16.msra.mxu0 0
        %403 = vmatprep.subr.bf16.mxu0 0
        %404 = vmatpush1.bf16.msra.mxu0 0
        %405 = vmatprep.subr.bf16.mxu0 0
        %406 = vmatpush1.bf16.msra.mxu0 0
        %407 = vmatprep.mubr.bf16.mxu0 0
        %408 = vmatmul.mubr.bf16.gmra.mrb[0].mxu0 %v293
        %v409 = vpop.f32.mrb[0].mxu0
        %v410 = vadd.f32 0.0, %v409
        %v411 = vpop.f32.mrb[0].mxu0
        %v412 = vadd.f32 0.0, %v411
        %v413 = vpop.f32.mrb[0].mxu0
        %v414 = vadd.f32 0.0, %v413
        %v415 = vpop.f32.mrb[0].mxu0
        %v416 = vadd.f32 0.0, %v415
        %417 = vdwg.mxu0
        %v418 = vld [vmem:[%s229] sm:$0xf]
        %v419 = vld [vmem:[%s229 + $0x4] sm:$0xf]
        %v422 = vunpack.c.l.b16 %v418
        %v423 = vunpack.c.l.b16 %v419
        %v424 = vpack.c.b16 %v423, %v422
        %426 = vmatprep.subr.bf16.mxu0 %v344
        %427 = vmatpush1.bf16.msra.mxu0 %v343
        %428 = vmatprep.subr.bf16.mxu0 %v346
        %429 = vmatpush1.bf16.msra.mxu0 %v345
        %430 = vmatprep.subr.bf16.mxu0 %v348
        %431 = vmatpush1.bf16.msra.mxu0 %v347
        %432 = vmatprep.subr.bf16.mxu0 %v350
        %433 = vmatpush1.bf16.msra.mxu0 %v349
        %434 = vmatprep.subr.bf16.mxu0 %v352
        %435 = vmatpush1.bf16.msra.mxu0 %v351
        %436 = vmatprep.subr.bf16.mxu0 %v354
        %437 = vmatpush1.bf16.msra.mxu0 %v353
        %438 = vmatprep.subr.bf16.mxu0 %v356
        %439 = vmatpush1.bf16.msra.mxu0 %v355
        %440 = vmatprep.subr.bf16.mxu0 %v358
        %441 = vmatpush1.bf16.msra.mxu0 %v357
        %442 = vmatprep.subr.bf16.mxu0 0
        %443 = vmatpush1.bf16.msra.mxu0 0
        %444 = vmatprep.subr.bf16.mxu0 0
        %445 = vmatpush1.bf16.msra.mxu0 0
        %446 = vmatprep.subr.bf16.mxu0 0
        %447 = vmatpush1.bf16.msra.mxu0 0
        %448 = vmatprep.subr.bf16.mxu0 0
        %449 = vmatpush1.bf16.msra.mxu0 0
        %450 = vmatprep.subr.bf16.mxu0 0
        %451 = vmatpush1.bf16.msra.mxu0 0
        %452 = vmatprep.subr.bf16.mxu0 0
        %453 = vmatpush1.bf16.msra.mxu0 0
        %454 = vmatprep.subr.bf16.mxu0 0
        %455 = vmatpush1.bf16.msra.mxu0 0
        %456 = vmatprep.subr.bf16.mxu0 0
        %457 = vmatpush1.bf16.msra.mxu0 0
        %458 = vmatprep.mubr.bf16.mxu0 0
        %459 = vmatmul.mubr.bf16.gmra.mrb[0].mxu0 %v424
        %v460 = vpop.f32.mrb[0].mxu0
        %v461 = vadd.f32 0.0, %v460
        %v462 = vpop.f32.mrb[0].mxu0
        %v463 = vadd.f32 0.0, %v462
        %v464 = vpop.f32.mrb[0].mxu0
        %v465 = vadd.f32 0.0, %v464
        %v466 = vpop.f32.mrb[0].mxu0
        %v467 = vadd.f32 0.0, %v466
        %468 = vdwg.mxu0
        %v469 = vmul.f32 %v410, %v410
        %v470 = vmul.f32 %v414, %v414
        %v471 = vmul.f32 %v412, %v412
        %v472 = vmul.f32 %v416, %v416
        %v473 = vadd.f32 %v469, %v471
        %v474 = vadd.f32 %v470, %v472
        %v475 = vrsqrt.pop %v473
        %v476 = vmul.f32 %v473, %v475
        %vm477 = vcmp.eq.f32.partialorder %v473, inf
        %v478 = vsel %vm477, %v473, %v476
        %vm479 = vcmp.eq.f32.partialorder %v473, 0.0
        %v480 = vand.u32 %v473, 2147483648
        %v481 = vsel %vm479, %v480, %v478
        %v482 = vrsqrt.pop %v474
        %v483 = vmul.f32 %v474, %v482
        %vm484 = vcmp.eq.f32.partialorder %v474, inf
        %v485 = vsel %vm484, %v474, %v483
        %vm486 = vcmp.eq.f32.partialorder %v474, 0.0
        %v487 = vand.u32 %v474, 2147483648
        %v488 = vsel %vm486, %v487, %v485
        %v489 = vmax.f32 %v481, 1e-08
        %v490 = vmax.f32 %v488, 1e-08
        %v491 = vmul.f32 %v461, %v461
        %v492 = vmul.f32 %v465, %v465
        %v493 = vmul.f32 %v463, %v463
        %v494 = vmul.f32 %v467, %v467
        %v495 = vadd.f32 %v491, %v493
        %v496 = vadd.f32 %v492, %v494
        %v497 = vrsqrt.pop %v495
        %v498 = vmul.f32 %v495, %v497
        %vm499 = vcmp.eq.f32.partialorder %v495, inf
        %v500 = vsel %vm499, %v495, %v498
        %vm501 = vcmp.eq.f32.partialorder %v495, 0.0
        %v502 = vand.u32 %v495, 2147483648
        %v503 = vsel %vm501, %v502, %v500
        %v504 = vrsqrt.pop %v496
        %v505 = vmul.f32 %v496, %v504
        %vm506 = vcmp.eq.f32.partialorder %v496, inf
        %v507 = vsel %vm506, %v496, %v505
        %vm508 = vcmp.eq.f32.partialorder %v496, 0.0
        %v509 = vand.u32 %v496, 2147483648
        %v510 = vsel %vm508, %v509, %v507
        %v511 = vmax.f32 %v503, 1e-08
        %v512 = vmax.f32 %v510, 1e-08
        %v513 = vsub.f32 %v489, %v511
        %v514 = vsub.f32 %v490, %v512
        %v515 = vand.u32 2147483647, %v513
        %v516 = vand.u32 2147483647, %v514
        %v517 = vld [vmem:[%s260] sm:$0xff]
        %v518 = vadd.f32 %v515, %v516
        %v519 = vadd.f32 %v517, %v518
        %520 = vst [vmem:[%s260] sm:$0xff] %v519
        %s521 = sand.u32 %s120, 1
        %s522 = scalar_lea.sflag [#allocation4], %s521
        %s523 = sand.u32 %s120, 1
        %s524 = smul.addr %s523, 8
        %s525 = scalar_lea.vmem [#allocation8], %s524
        // Predicated region
        $region49: #{tpu_custom_call.1} parent=31 // pred_check
          %p526 = pneg %p130
        $region50: #{tpu_custom_call.1} parent=31 // pred_check_branch
          %528 = sbr.rel (%p526) target = $region52
        $region51: #{tpu_custom_call.1} parent=31 // pred_region
          %s530 = ssub.s32 128, 128
          %531 = vsyncadd %s522, %s530
          %s532 = smul.addr %s27, 128
          %s533 = scalar_lea.hbm %s3, %s532
          %s535 = sshll.u32 %s525, 4
          %s536 = int_to_ptr.vmem [resolvable:$true] %s535
          %538 = dma.vmem_to_hbm [thread:$0]  %s536, 128, %s533, %s522
        $region52: #{tpu_custom_call.1} parent=31 // pred_fallthru
          _
      $region32: #{tpu_custom_call.1} parent=5 // pred_fallthru
        _
      %p539 = scmp.le.s32.totalorder 2, %s18
      // Predicated region
      $region53: #{tpu_custom_call.1} parent=5 // pred_check
        %p540 = pneg %p539
      $region54: #{tpu_custom_call.1} parent=5 // pred_check_branch
        %542 = sbr.rel (%p540) target = $region56
      $region55: #{tpu_custom_call.1} parent=5 // pred_region
        %s543 = ssub.s32 %s18, 2
        // Predicated region
        $region57: #{tpu_custom_call.1} parent=55 // pred_check
          %p544 = pneg %p136
        $region58: #{tpu_custom_call.1} parent=55 // pred_check_branch
          %546 = sbr.rel (%p544) target = $region60
        $region59: #{tpu_custom_call.1} parent=55 // pred_region
          %s547 = sand.u32 %s121, 1
          %s548 = scalar_lea.sflag [#allocation4], %s547
          %s549 = sand.u32 %s121, 1
          %s550 = smul.addr %s549, 8
          %s551 = scalar_lea.vmem [#allocation8], %s550
          %552 = dma.done %s548, 128
        $region60: #{tpu_custom_call.1} parent=55 // pred_fallthru
          _
      $region56: #{tpu_custom_call.1} parent=5 // pred_fallthru
        _
    $region6: #{tpu_custom_call.1} parent=1 // loop_footer
      %s22 = sadd.s32 1, %s18
    $region7: #{tpu_custom_call.1} parent=1 // loop_footer_branch
      %17 = sbr.rel target = $region3
    $region8: #{tpu_custom_call.1} parent=1 // loop_exit
      _
    %553 = vsyncpa [#allocation3], 1
    %s554 = scalar_lea.sflag [#allocation3], 1
    %555 = vsyncpa %s554, 1
    %556 = vsyncpa [#allocation6], 1
    %s557 = scalar_lea.sflag [#allocation6], 1
    %558 = vsyncpa %s557, 1
    %559 = vsyncpa [#allocation4], 1
    %s560 = scalar_lea.sflag [#allocation4], 1
    %561 = vsyncpa %s560, 1

</llo_original>
